<compile_context>
chip_gen: v5e
topology: v5e:2x2
jax: 0.10.0
libtpu: 0.0.40
codegen_flags: <defaults>
</compile_context>

<pallas_src>
import functools

import jax
import jax.numpy as jnp
from jax.experimental import pallas as pl
from jax.experimental.pallas import tpu as pltpu


_VMEM_LIMIT_BYTES = 48 * 1024 * 1024      # safe on v7x (64 MiB physical), > default on v5e/v6e
_WORKING_SET_BUDGET = 36 * 1024 * 1024    # budget for double-buffered input + output blocks


# ----------------------------- fused single-pass kernel -----------------------------

def _se_fused_kernel(x_ref, w1_ref, w2_ref, o_ref):
    # x_ref block: (Bt, C, L) for a tile of batch elements.
    # Squeeze: mean over L (f32 accumulation).
    pooled = jnp.mean(x_ref[...].astype(jnp.float32), axis=-1)            # (Bt, C)
    # Excite: two small matmuls + ReLU + sigmoid, all in f32.
    h = jnp.dot(pooled, w1_ref[...], preferred_element_type=jnp.float32)  # (Bt, H)
    h = jnp.maximum(h, 0.0)
    s = jnp.dot(h, w2_ref[...], preferred_element_type=jnp.float32)       # (Bt, C)
    s = jax.nn.sigmoid(s)
    # Scale: re-read x from VMEM (don't keep the big block live across the excite path).
    o_ref[...] = (x_ref[...].astype(jnp.float32) * s[:, :, None]).astype(o_ref.dtype)


def _fused_call(x, w1, w2, bt, vmem_limit):
    B, C, L = x.shape
    H = w1.shape[1]
    return pl.pallas_call(
        _se_fused_kernel,
        out_shape=jax.ShapeDtypeStruct((B, C, L), x.dtype),
        grid=(pl.cdiv(B, bt),),
        in_specs=[
            pl.BlockSpec((bt, C, L), lambda b: (b, 0, 0)),
            pl.BlockSpec((C, H), lambda b: (0, 0)),
            pl.BlockSpec((H, C), lambda b: (0, 0)),
        ],
        out_specs=pl.BlockSpec((bt, C, L), lambda b: (b, 0, 0)),
        compiler_params=pltpu.CompilerParams(
            dimension_semantics=("parallel",),
            vmem_limit_bytes=vmem_limit),
    )(x, w1, w2)


# --------------------------- two-pass fallback (large L) ----------------------------

def _se_scale_kernel(x_ref, w1_ref, w2_ref, scale_ref, acc_ref, *, l_total):
    # grid = (batch tiles, L tiles); L axis is last and "arbitrary" (reduction).
    li = pl.program_id(1)
    lt = x_ref.shape[-1]

    @pl.when(li == 0)
    def _():
        acc_ref[...] = jnp.zeros_like(acc_ref)

    x = x_ref[...].astype(jnp.float32)                                    # (Bt, C, Lt)
    if l_total % lt != 0:
        # Mask the padded tail of the last L tile so it doesn't pollute the mean.
        col = jax.lax.broadcasted_iota(jnp.int32, x.shape, 2) + li * lt
        x = jnp.where(col < l_total, x, 0.0)
    acc_ref[...] += jnp.sum(x, axis=-1)                                   # (Bt, C)

    @pl.when(li == pl.num_programs(1) - 1)
    def _():
        pooled = acc_ref[...] * (1.0 / l_total)
        h = jnp.maximum(
            jnp.dot(pooled, w1_ref[...], preferred_element_type=jnp.float32), 0.0)
        s = jax.nn.sigmoid(
            jnp.dot(h, w2_ref[...], preferred_element_type=jnp.float32))
        scale_ref[...] = s.astype(scale_ref.dtype)


def _se_apply_kernel(x_ref, scale_ref, o_ref):
    s = scale_ref[...].astype(jnp.float32)                                # (Bt, C)
    o_ref[...] = (x_ref[...].astype(jnp.float32) * s[:, :, None]).astype(o_ref.dtype)


def _two_pass_call(x, w1, w2, bt, lt, vmem_limit):
    B, C, L = x.shape
    H = w1.shape[1]
    nb = pl.cdiv(B, bt)
    nl = pl.cdiv(L, lt)

    # Pass 1: scale = sigmoid(relu(mean_L(x) @ W1) @ W2), L tiled with an accumulator.
    scale = pl.pallas_call(
        functools.partial(_se_scale_kernel, l_total=L),
        out_shape=jax.ShapeDtypeStruct((B, C), jnp.float32),
        grid=(nb, nl),
        in_specs=[
            pl.BlockSpec((bt, C, lt), lambda b, l: (b, 0, l)),
            pl.BlockSpec((C, H), lambda b, l: (0, 0)),   # weight block index const -> no re-DMA
            pl.BlockSpec((H, C), lambda b, l: (0, 0)),
        ],
        out_specs=pl.BlockSpec((bt, C), lambda b, l: (b, 0)),
        scratch_shapes=[pltpu.VMEM((bt, C), jnp.float32)],
        compiler_params=pltpu.CompilerParams(
            dimension_semantics=("parallel", "arbitrary"),
            vmem_limit_bytes=vmem_limit),
    )(x, w1, w2)

    # Pass 2: elementwise x * scale with lane-dense (multiple-of-128) L tiles.
    return pl.pallas_call(
        _se_apply_kernel,
        out_shape=jax.ShapeDtypeStruct((B, C, L), x.dtype),
        grid=(nb, nl),
        in_specs=[
            pl.BlockSpec((bt, C, lt), lambda b, l: (b, 0, l)),
            pl.BlockSpec((bt, C), lambda b, l: (b, 0)),
        ],
        out_specs=pl.BlockSpec((bt, C, lt), lambda b, l: (b, 0, l)),
        compiler_params=pltpu.CompilerParams(
            dimension_semantics=("parallel", "parallel"),
            vmem_limit_bytes=vmem_limit),
    )(x, scale)


# ------------------------------------ wrapper ---------------------------------------

def squeeze_and_excitation(x, w1, w2, *, block_b=None, block_l=None,
                           force_two_pass=False,
                           vmem_limit_bytes=_VMEM_LIMIT_BYTES):
    """SE forward. x: (B, C, L); w1: (C, C//ratio); w2: (C//ratio, C), pre-transposed
    so the kernel does x @ W directly (torch Linear stores (out, in))."""
    B, C, L = x.shape
    itemsize = jnp.dtype(x.dtype).itemsize
    budget = _WORKING_SET_BUDGET

    # Batch tile: amortize per-grid-step overhead and give the matmuls M > 1,
    # but keep >= 2 grid steps when possible so both v7x TensorCores get work.
    if block_b is None:
        bt = min(B, 8)
        if B >= 2 and pl.cdiv(B, bt) < 2:
            bt = pl.cdiv(B, 2)
    else:
        bt = max(1, min(block_b, B))

    def fused_bytes(b):
        # double-buffered input + output block
        return 4 * b * C * L * itemsize

    if not force_two_pass:
        bt_f = bt
        while bt_f > 1 and fused_bytes(bt_f) > budget:
            bt_f //= 2
        if fused_bytes(bt_f) <= budget:
            return _fused_call(x, w1, w2, bt_f, vmem_limit_bytes)

    # Two-pass fallback. The (bt, C) scale block needs bt % 8 == 0 or bt == B.
    if bt != B and bt % 8 != 0:
        bt = min(B, 8)
    if block_l is not None:
        lt = block_l
    else:
        lt = 2048
        while lt > 128 and 4 * bt * C * lt * itemsize > budget:
            lt //= 2
    lt = max(128, min(lt, ((L + 127) // 128) * 128))
    return _two_pass_call(x, w1, w2, bt, lt, vmem_limit_bytes)


def reference(x, w1, w2):
    pooled = jnp.mean(x, axis=-1)
    h = jnp.maximum(pooled @ w1, 0.0)
    s = jax.nn.sigmoid(h @ w2)
    return x * s[:, :, None]


if __name__ == "__main__":
    # Shapes implied by the module: inputs (B, C, L); channel=C, ratio=2 -> hidden = C // 2.
    B, C, L = 8, 16, 256          # small, lane-aligned (L multiple of 128)
    ratio = 2
    H = C // ratio

    key = jax.random.PRNGKey(0)
    kx, k1, k2 = jax.random.split(key, 3)
    x = jax.random.normal(kx, (B, C, L), dtype=jnp.float32)
    w1 = jax.random.normal(k1, (C, H), dtype=jnp.float32) * (1.0 / jnp.sqrt(C))
    w2 = jax.random.normal(k2, (H, C), dtype=jnp.float32) * (1.0 / jnp.sqrt(H))

    ref = reference(x, w1, w2)

    # Fused single-pass path (default).
    out = jax.block_until_ready(squeeze_and_excitation(x, w1, w2))
    assert out.shape == (B, C, L)
    assert jnp.allclose(out, ref, atol=1e-5, rtol=1e-5), "fused path mismatch vs reference"

    # Two-pass (scale then apply) fallback path, forced, with L tiling.
    out2 = jax.block_until_ready(
        squeeze_and_excitation(x, w1, w2, force_two_pass=True, block_l=128))
    assert jnp.allclose(out2, ref, atol=1e-5, rtol=1e-5), "two-pass path mismatch vs reference"

    # Non-128-multiple length exercises the masked partial L tile in the two-pass path.
    L2 = 200
    x2 = jax.random.normal(kx, (B, C, L2), dtype=jnp.float32)
    ref2 = reference(x2, w1, w2)
    out3 = jax.block_until_ready(
        squeeze_and_excitation(x2, w1, w2, force_two_pass=True, block_l=128))
    assert jnp.allclose(out3, ref2, atol=1e-5, rtol=1e-5), "masked two-pass mismatch vs reference"

    print("KERNEL_OK")
</pallas_src>

<mosaic_0001>
module attributes {stable_mosaic.version = 11 : i64} {
  func.func @_se_fused_kernel(%arg0: i32, %arg1: memref<4x16x256xf32, #tpu.memory_space<vmem>>, %arg2: memref<16x8xf32, #tpu.memory_space<vmem>>, %arg3: memref<8x16xf32, #tpu.memory_space<vmem>>, %arg4: memref<4x16x256xf32, #tpu.memory_space<vmem>>) attributes {dimension_semantics = [#tpu.dimension_semantics<parallel>], iteration_bounds = array<i64: 2>, scalar_prefetch = 0 : i64, scratch_operands = 0 : i64, tpu.core_type = #tpu.core_type<tc>, window_params = [{transform_indices = @transform_0, window_bounds = array<i64: 4, 16, 256>}, {pipeline_mode = #tpu.pipeline_mode<synchronous>, transform_indices = @transform_1, window_bounds = array<i64: 16, 8>}, {pipeline_mode = #tpu.pipeline_mode<synchronous>, transform_indices = @transform_2, window_bounds = array<i64: 8, 16>}, {transform_indices = @transform_3, window_bounds = array<i64: 4, 16, 256>}]} {
    %c0 = arith.constant 0 : index
    %c0_0 = arith.constant 0 : index
    %c0_1 = arith.constant 0 : index
    %0 = vector.load %arg1[%c0, %c0_0, %c0_1] : memref<4x16x256xf32, #tpu.memory_space<vmem>>, vector<4x16x256xf32>
    %cst = arith.constant dense<0.000000e+00> : vector<4x16xf32>
    %1 = vector.multi_reduction <add>, %0, %cst [2] : vector<4x16x256xf32> to vector<4x16xf32>
    %cst_2 = arith.constant 2.560000e+02 : f32
    %2 = vector.broadcast %cst_2 : f32 to vector<4x16xf32>
    %3 = arith.divf %1, %2 : vector<4x16xf32>
    %c0_3 = arith.constant 0 : index
    %c0_4 = arith.constant 0 : index
    %4 = vector.load %arg2[%c0_3, %c0_4] : memref<16x8xf32, #tpu.memory_space<vmem>>, vector<16x8xf32>
    %cst_5 = arith.constant dense<0.000000e+00> : vector<4x8xf32>
    %5 = tpu.matmul %3, %4, %cst_5 {dimension_numbers = #tpu.dot_dimension_numbers<[1], [0], [0], [1], [0, 0, 1, 1], [], []>} : vector<4x16xf32>, vector<16x8xf32>, vector<4x8xf32> -> vector<4x8xf32>
    %cst_6 = arith.constant 0.000000e+00 : f32
    %6 = vector.broadcast %cst_6 : f32 to vector<4x8xf32>
    %7 = arith.maximumf %5, %6 : vector<4x8xf32>
    %c0_7 = arith.constant 0 : index
    %c0_8 = arith.constant 0 : index
    %8 = vector.load %arg3[%c0_7, %c0_8] : memref<8x16xf32, #tpu.memory_space<vmem>>, vector<8x16xf32>
    %cst_9 = arith.constant dense<0.000000e+00> : vector<4x16xf32>
    %9 = tpu.matmul %7, %8, %cst_9 {dimension_numbers = #tpu.dot_dimension_numbers<[1], [0], [0], [1], [0, 0, 1, 1], [], []>} : vector<4x8xf32>, vector<8x16xf32>, vector<4x16xf32> -> vector<4x16xf32>
    %10 = arith.negf %9 : vector<4x16xf32>
    %11 = math.exp %10 : vector<4x16xf32>
    %cst_10 = arith.constant 1.000000e+00 : f32
    %12 = vector.broadcast %cst_10 : f32 to vector<4x16xf32>
    %13 = arith.addf %12, %11 : vector<4x16xf32>
    %14 = arith.divf %12, %13 : vector<4x16xf32>
    %c0_11 = arith.constant 0 : index
    %c0_12 = arith.constant 0 : index
    %c0_13 = arith.constant 0 : index
    %15 = vector.load %arg1[%c0_11, %c0_12, %c0_13] : memref<4x16x256xf32, #tpu.memory_space<vmem>>, vector<4x16x256xf32>
    %16 = vector.shape_cast %14 : vector<4x16xf32> to vector<4x16x1xf32>
    %17 = vector.broadcast %16 : vector<4x16x1xf32> to vector<4x16x256xf32>
    %18 = arith.mulf %15, %17 : vector<4x16x256xf32>
    %c0_14 = arith.constant 0 : index
    %c0_15 = arith.constant 0 : index
    %c0_16 = arith.constant 0 : index
    %19 = vector.load %arg4[%c0_14, %c0_15, %c0_16] : memref<4x16x256xf32, #tpu.memory_space<vmem>>, vector<4x16x256xf32>
    tpu.vector_store %arg4[%c0_14, %c0_15, %c0_16], %18 {strides = array<i32>} : memref<4x16x256xf32, #tpu.memory_space<vmem>>, vector<4x16x256xf32>,
    return
  }
  func.func @transform_0(%arg0: i32) -> (i32, i32, i32) {
    %c0_i32 = arith.constant 0 : i32
    %c0_i32_0 = arith.constant 0 : i32
    %c0_i32_1 = arith.constant 0 : i32
    return %arg0, %c0_i32, %c0_i32_0 : i32, i32, i32
  }
  func.func @transform_1(%arg0: i32) -> (i32, i32) {
    %c0_i32 = arith.constant 0 : i32
    %c0_i32_0 = arith.constant 0 : i32
    %c0_i32_1 = arith.constant 0 : i32
    return %c0_i32, %c0_i32_0 : i32, i32
  }
  func.func @transform_2(%arg0: i32) -> (i32, i32) {
    %c0_i32 = arith.constant 0 : i32
    %c0_i32_0 = arith.constant 0 : i32
    %c0_i32_1 = arith.constant 0 : i32
    return %c0_i32, %c0_i32_0 : i32, i32
  }
  func.func @transform_3(%arg0: i32) -> (i32, i32, i32) {
    %c0_i32 = arith.constant 0 : i32
    %c0_i32_0 = arith.constant 0 : i32
    %c0_i32_1 = arith.constant 0 : i32
    return %arg0, %c0_i32, %c0_i32_0 : i32, i32, i32
  }
}

</mosaic_0001>

<llo_original>
// kernel: tpu_custom_call.1
$region0: #{tpu_custom_call.1}
  #allocation0 [shape = 'u32[]', space=smem, size = 0x4, offset = 0x4, fixed_abs, tag = 'smem constant byte address 0x4 - core index']
  #allocation1 [shape = 'u32[72,128]{1,0:T(1,128)}', space=vmem, size = 0x9000, scoped, tag = 'internal scratch']
  %s0 = inlined_call_operand.hbm [shape: f32[8,16,256], index: 0, kind: input, shape index: {}]
  %s1 = inlined_call_operand.vmem [shape: f32[16,8], index: 1, kind: input, shape index: {}]
  %s2 = inlined_call_operand.vmem [shape: f32[8,16], index: 2, kind: input, shape index: {}]
  %s3 = inlined_call_operand.hbm [shape: f32[8,16,256], index: 3, kind: output, shape index: {}]
  %s4 = sld [smem:[#allocation0]]
  $region49: #{tpu_custom_call.1} parent=0
    _
  %s6 = ssub.s32 1, %s4
  %s7 = scalar_select 0, %s6, %s4
  $region1: #{tpu_custom_call.1} parent=0
    #allocation2 [shape = 'u8[131072]{0}', space=vmem, size = 0x20000, scoped, tag = 'input window, operand 0']
    #allocation3 [shape = 's32[2]{0}', space=sflag, size = 0x8, scoped, tag = 'scoped memory for tpu_custom_call.1']
    #allocation4 [shape = 's32[2]{0}', space=sflag, size = 0x8, scoped, tag = 'scoped memory for tpu_custom_call.1']
    #allocation5 [shape = 'u8[131072]{0}', space=vmem, size = 0x20000, scoped, tag = 'output window, operand 0']
    %8 = vsyncpa [#allocation3], 0
    %s9 = scalar_lea.sflag [#allocation3], 1
    %10 = vsyncpa %s9, 0
    %11 = vsyncpa [#allocation4], 0
    %s12 = scalar_lea.sflag [#allocation4], 1
    %13 = vsyncpa %s12, 0
    loop: start=0, step=1, limit=4
    $region2: #{tpu_custom_call.1} parent=1 // loop_pre_header
      _
    $region3: #{tpu_custom_call.1} parent=1 // loop_header
      %s15 = sphi 0, %s19
      %p16 = scmp.ge.s32.totalorder %s15, 4
      %s25 = sphi 0, %s27
      %s28 = sphi 0, %s25
      %s29 = sphi 0, %s28
      %s45 = sphi 0, %s29
      %s49 = sphi 0, %s49
      %s51 = sphi 0, %s49
      %s52 = sphi 0, %s51
      %s66 = sphi 0, %s52
      %s70 = sphi 0, %s70
      %s72 = sphi 0, %s70
      %s73 = sphi 0, %s72
      %s87 = sphi 0, %s73
      %s93 = sphi 0, %s95
      %s96 = sphi 0, %s93
      %s97 = sphi 0, %s96
      %s113 = sphi 0, %s97
    $region4: #{tpu_custom_call.1} parent=1 // loop_header_branch
      %18 = sbr.rel (%p16) target = $region8
    $region5: #{tpu_custom_call.1} parent=1 // loop_body
      %s20 = ssub.s32 %s15, 1
      %s21 = ssub.s32 %s15, 2
      %s22 = sadd.s32 %s15, 1
      %s23 = ssub.s32 %s15, %s22
      %p24 = scmp.eq.s32.totalorder %s23, 0
      %s26 = sadd.s32 %s25, 1
      %s27 = scalar_select %p24, %s25, %s26
      %p30 = pneg %p24
      %p31 = scmp.eq.s32.totalorder %s15, 1
      %p32 = por %p30, %p31
      %p33 = scmp.ne.s32.totalorder %s25, %s28
      %p34 = scmp.eq.s32.totalorder %s15, 0
      %p35 = por %p33, %p34
      %p36 = scmp.ne.s32.totalorder %s25, %s28
      %p37 = scmp.eq.s32.totalorder %s20, 1
      %p38 = por %p36, %p37
      %p39 = scmp.ne.s32.totalorder %s28, %s29
      %p40 = scmp.eq.s32.totalorder %s20, 0
      %p41 = por %p39, %p40
      %p42 = scmp.ne.s32.totalorder %s28, %s29
      %p43 = scmp.eq.s32.totalorder %s21, 1
      %p44 = por %p42, %p43
      %p46 = scmp.ne.s32.totalorder %s29, %s45
      %p47 = scmp.eq.s32.totalorder %s21, 0
      %p48 = por %p46, %p47
      %s50 = sadd.s32 %s49, 1
      %p53 = scmp.eq.s32.totalorder %s15, 1
      %p54 = scmp.ne.s32.totalorder %s49, %s51
      %p55 = scmp.eq.s32.totalorder %s15, 0
      %p56 = por %p54, %p55
      %p57 = scmp.ne.s32.totalorder %s49, %s51
      %p58 = scmp.eq.s32.totalorder %s20, 1
      %p59 = por %p57, %p58
      %p60 = scmp.ne.s32.totalorder %s51, %s52
      %p61 = scmp.eq.s32.totalorder %s20, 0
      %p62 = por %p60, %p61
      %p63 = scmp.ne.s32.totalorder %s51, %s52
      %p64 = scmp.eq.s32.totalorder %s21, 1
      %p65 = por %p63, %p64
      %p67 = scmp.ne.s32.totalorder %s52, %s66
      %p68 = scmp.eq.s32.totalorder %s21, 0
      %p69 = por %p67, %p68
      %s71 = sadd.s32 %s70, 1
      %p74 = scmp.eq.s32.totalorder %s15, 1
      %p75 = scmp.ne.s32.totalorder %s70, %s72
      %p76 = scmp.eq.s32.totalorder %s15, 0
      %p77 = por %p75, %p76
      %p78 = scmp.ne.s32.totalorder %s70, %s72
      %p79 = scmp.eq.s32.totalorder %s20, 1
      %p80 = por %p78, %p79
      %p81 = scmp.ne.s32.totalorder %s72, %s73
      %p82 = scmp.eq.s32.totalorder %s20, 0
      %p83 = por %p81, %p82
      %p84 = scmp.ne.s32.totalorder %s72, %s73
      %p85 = scmp.eq.s32.totalorder %s21, 1
      %p86 = por %p84, %p85
      %p88 = scmp.ne.s32.totalorder %s73, %s87
      %p89 = scmp.eq.s32.totalorder %s21, 0
      %p90 = por %p88, %p89
      %s91 = ssub.s32 %s15, %s22
      %p92 = scmp.eq.s32.totalorder %s91, 0
      %s94 = sadd.s32 %s93, 1
      %s95 = scalar_select %p92, %s93, %s94
      %p98 = pneg %p92
      %p99 = scmp.eq.s32.totalorder %s15, 1
      %p100 = por %p98, %p99
      %p101 = scmp.ne.s32.totalorder %s93, %s96
      %p102 = scmp.eq.s32.totalorder %s15, 0
      %p103 = por %p101, %p102
      %p104 = scmp.ne.s32.totalorder %s93, %s96
      %p105 = scmp.eq.s32.totalorder %s20, 1
      %p106 = por %p104, %p105
      %p107 = scmp.ne.s32.totalorder %s96, %s97
      %p108 = scmp.eq.s32.totalorder %s20, 0
      %p109 = por %p107, %p108
      %p110 = scmp.ne.s32.totalorder %s96, %s97
      %p111 = scmp.eq.s32.totalorder %s21, 1
      %p112 = por %p110, %p111
      %p114 = scmp.ne.s32.totalorder %s97, %s113
      %p115 = scmp.eq.s32.totalorder %s21, 0
      %p116 = por %p114, %p115
      %p117 = scmp.le.s32.totalorder 1, %s15
      %p118 = scmp.lt.s32.totalorder %s15, 3
      %p119 = pnand %p117, %p118
      %p120 = pneg %p119
      // Predicated region
      $region9: #{tpu_custom_call.1} parent=5 // pred_check
        _
      $region10: #{tpu_custom_call.1} parent=5 // pred_check_branch
        %122 = sbr.rel (%p119) target = $region12
      $region11: #{tpu_custom_call.1} parent=5 // pred_region
        %s123 = ssub.s32 %s15, 1
        // Predicated region
        $region13: #{tpu_custom_call.1} parent=11 // pred_check
          %p124 = pneg %p62
        $region14: #{tpu_custom_call.1} parent=11 // pred_check_branch
          %126 = sbr.rel (%p124) target = $region16
        $region15: #{tpu_custom_call.1} parent=11 // pred_region
          _
        $region16: #{tpu_custom_call.1} parent=11 // pred_fallthru
          _
        // Predicated region
        $region17: #{tpu_custom_call.1} parent=11 // pred_check
          %p127 = pneg %p83
        $region18: #{tpu_custom_call.1} parent=11 // pred_check_branch
          %129 = sbr.rel (%p127) target = $region20
        $region19: #{tpu_custom_call.1} parent=11 // pred_region
          _
        $region20: #{tpu_custom_call.1} parent=11 // pred_fallthru
          _
      $region12: #{tpu_custom_call.1} parent=5 // pred_fallthru
        _
      %p130 = scmp.lt.s32.totalorder %s15, 2
      // Predicated region
      $region21: #{tpu_custom_call.1} parent=5 // pred_check
        %p131 = pneg %p130
      $region22: #{tpu_custom_call.1} parent=5 // pred_check_branch
        %133 = sbr.rel (%p131) target = $region24
      $region23: #{tpu_custom_call.1} parent=5 // pred_region
        // Predicated region
        $region25: #{tpu_custom_call.1} parent=23 // pred_check
          %p134 = pneg %p35
        $region26: #{tpu_custom_call.1} parent=23 // pred_check_branch
          %136 = sbr.rel (%p134) target = $region28
        $region27: #{tpu_custom_call.1} parent=23 // pred_region
          %s137 = sand.u32 %s25, 1
          %s138 = scalar_lea.sflag [#allocation3], %s137
          %s139 = sand.u32 %s25, 1
          %s140 = smul.addr %s139, 128
          %s141 = scalar_lea.vmem [#allocation2], %s140
          %s142 = smul.u32 4, %s15
          %144 = vsyncadd %s138, 0
          %s145 = smul.addr %s142, 4
          %s146 = smul.addr %s145, 8
          %s147 = scalar_lea.hbm %s0, %s146
          %s148 = sshll.u32 %s147, 4
          %s149 = int_to_ptr.hbm [resolvable:$true] %s148
          %s150 = sshll.u32 %s141, 4
          %s151 = int_to_ptr.vmem [resolvable:$true] %s150
          %156 = dma.hbm_to_vmem [thread:$0]  %s149, 2048, %s151, %s138, 256, 256, 16
        $region28: #{tpu_custom_call.1} parent=23 // pred_fallthru
          _
      $region24: #{tpu_custom_call.1} parent=5 // pred_fallthru
        _
      %p157 = scmp.le.s32.totalorder 1, %s15
      %p158 = scmp.lt.s32.totalorder %s15, 3
      %p159 = pnand %p157, %p158
      %p160 = pneg %p159
      // Predicated region
      $region29: #{tpu_custom_call.1} parent=5 // pred_check
        _
      $region30: #{tpu_custom_call.1} parent=5 // pred_check_branch
        %162 = sbr.rel (%p159) target = $region32
      $region31: #{tpu_custom_call.1} parent=5 // pred_region
        %s163 = ssub.s32 %s15, 1
        %s164 = sand.u32 %s28, 1
        %s165 = scalar_lea.sflag [#allocation3], %s164
        %s166 = sand.u32 %s28, 1
        %s167 = smul.addr %s166, 128
        %s168 = scalar_lea.vmem [#allocation2], %s167
        // Predicated region
        $region33: #{tpu_custom_call.1} parent=31 // pred_check
          %p169 = pneg %p41
        $region34: #{tpu_custom_call.1} parent=31 // pred_check_branch
          %171 = sbr.rel (%p169) target = $region36
        $region35: #{tpu_custom_call.1} parent=31 // pred_region
          %173 = dma.done %s165, 2048
        $region36: #{tpu_custom_call.1} parent=31 // pred_fallthru
          _
        %s174 = sand.u32 %s28, 1
        %s175 = scalar_lea.sflag [#allocation3], %s174
        %s176 = sand.u32 %s28, 1
        %s177 = smul.addr %s176, 128
        %s178 = scalar_lea.vmem [#allocation2], %s177
        %p179 = pneg %p41
        %p180 = pneg %p38
        %p181 = pneg %p62
        %p182 = pneg %p59
        %p183 = pneg %p83
        %p184 = pneg %p80
        %p185 = pneg %p109
        %p186 = pneg %p106
        %s187 = sand.u32 %s96, 1
        %s188 = scalar_lea.sflag [#allocation4], %s187
        %s189 = sand.u32 %s96, 1
        %s190 = smul.addr %s189, 128
        %s191 = scalar_lea.vmem [#allocation5], %s190
        %s192 = smul.u32 4, %s20
        %s193 = smul.u32 4, %s20
        %v194 = vld [vmem:[%s168] sm:$0xff]
        %v195 = vld [vmem:[%s168 + $0x8] sm:$0xff]
        %v196 = vld [vmem:[%s168 + $0x10] sm:$0xff]
        %v197 = vld [vmem:[%s168 + $0x18] sm:$0xff]
        %v198 = vld [vmem:[%s168 + $0x20] sm:$0xff]
        %v199 = vld [vmem:[%s168 + $0x28] sm:$0xff]
        %v200 = vld [vmem:[%s168 + $0x30] sm:$0xff]
        %v201 = vld [vmem:[%s168 + $0x38] sm:$0xff]
        %v202 = vld [vmem:[%s168 + $0x40] sm:$0xff]
        %v203 = vld [vmem:[%s168 + $0x48] sm:$0xff]
        %v204 = vld [vmem:[%s168 + $0x50] sm:$0xff]
        %v205 = vld [vmem:[%s168 + $0x58] sm:$0xff]
        %v206 = vld [vmem:[%s168 + $0x60] sm:$0xff]
        %v207 = vld [vmem:[%s168 + $0x68] sm:$0xff]
        %v208 = vld [vmem:[%s168 + $0x70] sm:$0xff]
        %v209 = vld [vmem:[%s168 + $0x78] sm:$0xff]
        %v210 = vadd.f32 %v194, %v195
        %211 = vadd.xlane.f32.xlu0 %v210
        %v212 = vpop.xlane.xlu0 %211
        %v213 = vadd.f32 %v196, %v197
        %214 = vadd.xlane.f32.xlu0 %v213
        %v215 = vpop.xlane.xlu0 %214
        %v216 = vadd.f32 %v198, %v199
        %217 = vadd.xlane.f32.xlu0 %v216
        %v218 = vpop.xlane.xlu0 %217
        %v219 = vadd.f32 %v200, %v201
        %220 = vadd.xlane.f32.xlu0 %v219
        %v221 = vpop.xlane.xlu0 %220
        %v222 = vadd.f32 %v202, %v203
        %223 = vadd.xlane.f32.xlu0 %v222
        %v224 = vpop.xlane.xlu0 %223
        %v225 = vadd.f32 %v204, %v205
        %226 = vadd.xlane.f32.xlu0 %v225
        %v227 = vpop.xlane.xlu0 %226
        %v228 = vadd.f32 %v206, %v207
        %229 = vadd.xlane.f32.xlu0 %v228
        %v230 = vpop.xlane.xlu0 %229
        %v231 = vadd.f32 %v208, %v209
        %232 = vadd.xlane.f32.xlu0 %v231
        %v233 = vpop.xlane.xlu0 %232
        %v234 = vrcp.pop 256.0
        %v235 = vmul.f32 256.0, %v234
        %v236 = vsub.f32 1.0, %v235
        %v237 = vmul.f32 %v234, %v236
        %v238 = vadd.f32 %v234, %v237
        %vm239 = vweird.f32 %v234
        %v240 = vsel %vm239, %v234, %v238
        %v241 = vmul.f32 %v212, %v240
        %v242 = vmul.f32 %v215, %v240
        %v243 = vmul.f32 %v218, %v240
        %v244 = vmul.f32 %v221, %v240
        %v245 = vmul.f32 %v224, %v240
        %v246 = vmul.f32 %v227, %v240
        %v247 = vmul.f32 %v230, %v240
        %v248 = vmul.f32 %v233, %v240
        %v249 = vld [vmem:[%s1] sm:$0xff]
        %v250 = vld [vmem:[%s1 + $0x8] sm:$0xff]
        %v259 = vlaneseq
        %v260 = vand.u32 %v259, 127
        %v261 = vperm.slane %v241, %v260
        %v262 = vadd.s32 %v260, 4294967288
        %v263 = vperm.slane %v242, %v262
        %vm264 = vcmask 130112
        %v265 = vsel %vm264, %v263, %v261
        %v266 = vperm.slane %v243, %v260
        %v267 = vperm.slane %v244, %v262
        %v268 = vsel %vm264, %v267, %v266
        %v269 = vperm.slane %v245, %v260
        %v270 = vperm.slane %v246, %v262
        %v271 = vsel %vm264, %v270, %v269
        %v272 = vperm.slane %v247, %v260
        %v273 = vperm.slane %v248, %v262
        %v274 = vsel %vm264, %v273, %v272
        %vm275 = vcmask 1041409
        %v276 = vsel %vm275, %v268, %v265
        %vm277 = vcmask 1042434
        %v278 = vsel %vm277, %v271, %v276
        %vm279 = vcmask 1043459
        %v280 = vsel %vm279, %v274, %v278
        %vm281 = vcmask 130048
        %v282 = vsel %vm281, %v280, 0
        %284 = vmatpush.msra.mxu0 0.0
        %285 = vmatpush.msra.mxu0 0.0
        %286 = vmatpush.msra.mxu0 0.0
        %287 = vmatpush.msra.mxu0 0.0
        %288 = vmatpush.msra.mxu0 0.0
        %289 = vmatpush.msra.mxu0 0.0
        %290 = vmatpush.msra.mxu0 0.0
        %291 = vmatpush.msra.mxu0 0.0
        %292 = vmatpush.msra.mxu0 0.0
        %293 = vmatpush.msra.mxu0 0.0
        %294 = vmatpush.msra.mxu0 0.0
        %295 = vmatpush.msra.mxu0 0.0
        %296 = vmatpush.msra.mxu0 0.0
        %297 = vmatpush.msra.mxu0 0.0
        %298 = vmatpush.msra.mxu0 %v250
        %299 = vmatpush.msra.mxu0 %v249
        %300 = vmatmul.f32.gmra.mxu0 %v282
        %v301 = vpop.f32.mrf.mxu0
        %v302 = vadd.f32 0.0, %v301
        %303 = vdwg.mxu0
        %v304 = vmax.f32 %v302, 0.0
        %v305 = vld [vmem:[%s2] sm:$0xff]
        %vm306 = vcmask 64512
        %v308 = vsel %vm306, %v304, 0
        %310 = vmatpush.msra.mxu0 0.0
        %311 = vmatpush.msra.mxu0 0.0
        %312 = vmatpush.msra.mxu0 0.0
        %313 = vmatpush.msra.mxu0 0.0
        %314 = vmatpush.msra.mxu0 0.0
        %315 = vmatpush.msra.mxu0 0.0
        %316 = vmatpush.msra.mxu0 0.0
        %317 = vmatpush.msra.mxu0 0.0
        %318 = vmatpush.msra.mxu0 0.0
        %319 = vmatpush.msra.mxu0 0.0
        %320 = vmatpush.msra.mxu0 0.0
        %321 = vmatpush.msra.mxu0 0.0
        %322 = vmatpush.msra.mxu0 0.0
        %323 = vmatpush.msra.mxu0 0.0
        %324 = vmatpush.msra.mxu0 0.0
        %325 = vmatpush.msra.mxu0 %v305
        %326 = vmatmul.f32.gmra.mxu0 %v308
        %v327 = vpop.f32.mrf.mxu0
        %v328 = vadd.f32 0.0, %v327
        %329 = vdwg.mxu0
        %v330 = vxor.u32 %v328, 2147483648
        %v331 = vmul.f32 %v330, 1.442695
        %v332 = vpow.pop %v331
        %v333 = vadd.f32 %v332, 1.0
        %v334 = vrcp.pop %v333
        %v335 = vmul.f32 %v333, %v334
        %v336 = vsub.f32 1.0, %v335
        %v337 = vmul.f32 %v334, %v336
        %v338 = vadd.f32 %v334, %v337
        %vm339 = vweird.f32 %v333
        %vm340 = vweird.f32 %v334
        %vm341 = vmor %vm339, %vm340
        %v342 = vsel %vm341, %v334, %v338
        %v343 = vand.u32 2147483647, %v333
        %vm344 = vcmp.eq.f32.partialorder %v343, 8.507059e+37
        %v345 = vand.u32 %v333, 2147483648
        %v346 = vor.u32 1.1754944e-38, %v345
        %v347 = vsel %vm344, %v346, %v342
        %v348 = vmul.f32 1.0, %v347
        %v349 = vperm.slane %v348, 0
        %v350 = vlaneseq
        %v351 = vshrl.u32 %v350, 7
        %353 = vset.pattern.permute.xlu0 %v351
        %354 = vperm.xlu0 %353, %v349
        %v355 = vpop.permute.xlu0 %354
        %v356 = vlaneseq
        %v357 = vshrl.u32 %v356, 7
        %v358 = vadd.s32 %v357, 8
        %359 = vset.pattern.permute.xlu0 %v358
        %360 = vperm.xlu0 %359, %v349
        %v361 = vpop.permute.xlu0 %360
        %v362 = vperm.slane %v348, 1
        %v363 = vlaneseq
        %v364 = vshrl.u32 %v363, 7
        %366 = vset.pattern.permute.xlu0 %v364
        %367 = vperm.xlu0 %366, %v362
        %v368 = vpop.permute.xlu0 %367
        %v369 = vlaneseq
        %v370 = vshrl.u32 %v369, 7
        %v371 = vadd.s32 %v370, 8
        %372 = vset.pattern.permute.xlu0 %v371
        %373 = vperm.xlu0 %372, %v362
        %v374 = vpop.permute.xlu0 %373
        %v375 = vperm.slane %v348, 2
        %v376 = vlaneseq
        %v377 = vshrl.u32 %v376, 7
        %379 = vset.pattern.permute.xlu0 %v377
        %380 = vperm.xlu0 %379, %v375
        %v381 = vpop.permute.xlu0 %380
        %v382 = vlaneseq
        %v383 = vshrl.u32 %v382, 7
        %v384 = vadd.s32 %v383, 8
        %385 = vset.pattern.permute.xlu0 %v384
        %386 = vperm.xlu0 %385, %v375
        %v387 = vpop.permute.xlu0 %386
        %v388 = vperm.slane %v348, 3
        %v389 = vlaneseq
        %v390 = vshrl.u32 %v389, 7
        %392 = vset.pattern.permute.xlu0 %v390
        %393 = vperm.xlu0 %392, %v388
        %v394 = vpop.permute.xlu0 %393
        %v395 = vlaneseq
        %v396 = vshrl.u32 %v395, 7
        %v397 = vadd.s32 %v396, 8
        %398 = vset.pattern.permute.xlu0 %v397
        %399 = vperm.xlu0 %398, %v388
        %v400 = vpop.permute.xlu0 %399
        %v401 = vmul.f32 %v194, %v355
        %v402 = vmul.f32 %v195, %v355
        %v403 = vmul.f32 %v196, %v361
        %v404 = vmul.f32 %v197, %v361
        %v405 = vmul.f32 %v198, %v368
        %v406 = vmul.f32 %v199, %v368
        %v407 = vmul.f32 %v200, %v374
        %v408 = vmul.f32 %v201, %v374
        %v409 = vmul.f32 %v202, %v381
        %v410 = vmul.f32 %v203, %v381
        %v411 = vmul.f32 %v204, %v387
        %v412 = vmul.f32 %v205, %v387
        %v413 = vmul.f32 %v206, %v394
        %v414 = vmul.f32 %v207, %v394
        %v415 = vmul.f32 %v208, %v400
        %v416 = vmul.f32 %v209, %v400
        %417 = vst [vmem:[%s191] sm:$0xff] %v401
        %418 = vst [vmem:[%s191 + $0x8] sm:$0xff] %v402
        %419 = vst [vmem:[%s191 + $0x10] sm:$0xff] %v403
        %420 = vst [vmem:[%s191 + $0x18] sm:$0xff] %v404
        %421 = vst [vmem:[%s191 + $0x20] sm:$0xff] %v405
        %422 = vst [vmem:[%s191 + $0x28] sm:$0xff] %v406
        %423 = vst [vmem:[%s191 + $0x30] sm:$0xff] %v407
        %424 = vst [vmem:[%s191 + $0x38] sm:$0xff] %v408
        %425 = vst [vmem:[%s191 + $0x40] sm:$0xff] %v409
        %426 = vst [vmem:[%s191 + $0x48] sm:$0xff] %v410
        %427 = vst [vmem:[%s191 + $0x50] sm:$0xff] %v411
        %428 = vst [vmem:[%s191 + $0x58] sm:$0xff] %v412
        %429 = vst [vmem:[%s191 + $0x60] sm:$0xff] %v413
        %430 = vst [vmem:[%s191 + $0x68] sm:$0xff] %v414
        %431 = vst [vmem:[%s191 + $0x70] sm:$0xff] %v415
        %432 = vst [vmem:[%s191 + $0x78] sm:$0xff] %v416
        %s433 = sand.u32 %s96, 1
        %s434 = scalar_lea.sflag [#allocation4], %s433
        %s435 = sand.u32 %s96, 1
        %s436 = smul.addr %s435, 128
        %s437 = scalar_lea.vmem [#allocation5], %s436
        // Predicated region
        $region37: #{tpu_custom_call.1} parent=31 // pred_check
          %p438 = pneg %p106
        $region38: #{tpu_custom_call.1} parent=31 // pred_check_branch
          %440 = sbr.rel (%p438) target = $region40
        $region39: #{tpu_custom_call.1} parent=31 // pred_region
          %s441 = smul.u32 4, %s20
          %443 = vsyncadd %s434, 0
          %s444 = smul.addr %s441, 4
          %s445 = smul.addr %s444, 8
          %s446 = scalar_lea.hbm %s3, %s445
          %s447 = sshll.u32 %s437, 4
          %s448 = int_to_ptr.vmem [resolvable:$true] %s447
          %s449 = sshll.u32 %s446, 4
          %s450 = int_to_ptr.hbm [resolvable:$true] %s449
          %455 = dma.vmem_to_hbm [thread:$0]  %s448, 2048, %s450, %s434, 256, 256, 16
        $region40: #{tpu_custom_call.1} parent=31 // pred_fallthru
          _
      $region32: #{tpu_custom_call.1} parent=5 // pred_fallthru
        _
      %p456 = scmp.le.s32.totalorder 2, %s15
      // Predicated region
      $region41: #{tpu_custom_call.1} parent=5 // pred_check
        %p457 = pneg %p456
      $region42: #{tpu_custom_call.1} parent=5 // pred_check_branch
        %459 = sbr.rel (%p457) target = $region44
      $region43: #{tpu_custom_call.1} parent=5 // pred_region
        %s460 = ssub.s32 %s15, 2
        // Predicated region
        $region45: #{tpu_custom_call.1} parent=43 // pred_check
          %p461 = pneg %p112
        $region46: #{tpu_custom_call.1} parent=43 // pred_check_branch
          %463 = sbr.rel (%p461) target = $region48
        $region47: #{tpu_custom_call.1} parent=43 // pred_region
          %s464 = sand.u32 %s97, 1
          %s465 = scalar_lea.sflag [#allocation4], %s464
          %s466 = sand.u32 %s97, 1
          %s467 = smul.addr %s466, 128
          %s468 = scalar_lea.vmem [#allocation5], %s467
          %470 = dma.done %s465, 2048
        $region48: #{tpu_custom_call.1} parent=43 // pred_fallthru
          _
      $region44: #{tpu_custom_call.1} parent=5 // pred_fallthru
        _
    $region6: #{tpu_custom_call.1} parent=1 // loop_footer
      %s19 = sadd.s32 1, %s15
    $region7: #{tpu_custom_call.1} parent=1 // loop_footer_branch
      %14 = sbr.rel target = $region3
    $region8: #{tpu_custom_call.1} parent=1 // loop_exit
      _
    %471 = vsyncpa [#allocation3], 1
    %s472 = scalar_lea.sflag [#allocation3], 1
    %473 = vsyncpa %s472, 1
    %474 = vsyncpa [#allocation4], 1
    %s475 = scalar_lea.sflag [#allocation4], 1
    %476 = vsyncpa %s475, 1

</llo_original>
